<compile_context>
chip_gen: v6e
topology: v6e:2x2x1
jax: 0.10.0
libtpu: 0.0.40
codegen_flags: <defaults>
</compile_context>

<pallas_src>
import functools
import math

import jax
import jax.numpy as jnp
from jax.experimental import pallas as pl
from jax.experimental.pallas import tpu as pltpu


def _round_up(n, m):
    return ((n + m - 1) // m) * m


def _discriminator_kernel(x_ref, w_ref, b_ref, o_ref, acc_ref, *,
                          seq_len, block_k, mask_cols, w_resident):
    # x_ref: (tm, tk) VMEM      w_ref: (1, Sw) or (1, tk) VMEM
    # b_ref: (1, 1) SMEM        o_ref: (tm, 1) VMEM
    # acc_ref: (tm, 128) f32 VMEM scratch (lane-dense accumulator)
    k = pl.program_id(1)

    @pl.when(k == 0)
    def _():
        acc_ref[...] = jnp.zeros_like(acc_ref)

    x = x_ref[...].astype(jnp.float32)                       # (tm, tk)
    if w_resident:
        w = w_ref[:, pl.ds(pl.multiple_of(k * block_k, 128), block_k)]
    else:
        w = w_ref[...]
    prod = x * w.astype(jnp.float32)                         # VPU, bcast over sublanes

    if mask_cols:
        # Ragged last k tile: out-of-bounds lanes hold unspecified data; mask
        # them to zero before accumulating (select, so NaN/Inf cannot leak).
        col = k * block_k + jax.lax.broadcasted_iota(jnp.int32, prod.shape, 1)
        prod = jnp.where(col < seq_len, prod, 0.0)

    # Lane-dense accumulation: fold tk into 128-lane chunks with plain,
    # unmasked VALU adds; single vld + vst of the (tm, 128) accumulator.
    acc = acc_ref[...]
    for c in range(block_k // 128):
        acc = acc + prod[:, c * 128:(c + 1) * 128]
    acc_ref[...] = acc

    @pl.when(k == pl.num_programs(1) - 1)
    def _():
        # One cross-lane (XLU) reduce per output tile, scalar bias from SMEM.
        z = jnp.sum(acc_ref[...], axis=-1, keepdims=True) + b_ref[0, 0]
        o_ref[...] = jax.nn.sigmoid(z).astype(o_ref.dtype)


def discriminator_forward(x, w, b, *, block_m=1024, block_k=1024):
    """x: (B, S) f32/bf16, w: (1, S) (PyTorch layout), b: (1, 1) -> (B, 1) f32."""
    B, S = x.shape
    assert w.shape == (1, S)
    b = jnp.asarray(b, jnp.float32).reshape(1, 1)

    # Sublane granularity depends on x dtype packing (f32: 8, bf16: 16, 8-bit: 32).
    sub = 8 * (4 // jnp.dtype(x.dtype).itemsize)
    block_m = _round_up(block_m, sub)
    block_k = _round_up(block_k, 128)

    tm = min(block_m, _round_up(B, sub))
    # v7x megacore: give the "parallel" batch axis >= 2 tiles when B allows it
    # (one extra ~0.35us grid step on single-TC chips; up to ~2x on v7x).
    if B > sub and pl.cdiv(B, tm) < 2:
        tm = _round_up(pl.cdiv(B, 2), sub)
    tk = min(block_k, _round_up(S, 128))

    nk = pl.cdiv(S, tk)
    Sw = nk * tk
    grid = (pl.cdiv(B, tm), nk)
    mask_cols = (S % tk) != 0

    # Hoist the weight row as a single resident block (DMA'd once) unless it is
    # so long that its 8-sublane-padded double buffer would waste VMEM.
    w_resident = (8 * Sw * 4 * 2) <= (8 * 1024 * 1024)
    wk = w.astype(jnp.float32)
    if Sw != S:
        wk = jnp.pad(wk, ((0, 0), (0, Sw - S)))   # tiny (1, S) row only; x is NOT padded
    if w_resident:
        w_spec = pl.BlockSpec((1, Sw), lambda i, k: (0, 0))
    else:
        w_spec = pl.BlockSpec((1, tk), lambda i, k: (0, k))

    kernel = functools.partial(
        _discriminator_kernel,
        seq_len=S, block_k=tk, mask_cols=mask_cols, w_resident=w_resident,
    )

    out = pl.pallas_call(
        kernel,
        out_shape=jax.ShapeDtypeStruct((B, 1), jnp.float32),
        grid_spec=pltpu.PrefetchScalarGridSpec(
            num_scalar_prefetch=0,
            grid=grid,
            in_specs=[
                pl.BlockSpec((tm, tk), lambda i, k: (i, k)),        # x tiles (streamed)
                w_spec,                                             # weight row (resident)
                pl.BlockSpec(memory_space=pltpu.MemorySpace.SMEM),  # bias scalar
            ],
            out_specs=pl.BlockSpec((tm, 1), lambda i, k: (i, 0)),
            scratch_shapes=[pltpu.VMEM((tm, 128), jnp.float32)],    # lane-dense acc
        ),
        compiler_params=pltpu.CompilerParams(
            # Batch axis parallel (2 TCs on v7x), reduction axis arbitrary.
            dimension_semantics=("parallel", "arbitrary"),
            # Safe on v7x (64 MiB/TC) and v5e/v6e (128 MiB); defaults fit easily.
            vmem_limit_bytes=32 * 1024 * 1024,
        ),
        cost_estimate=pl.CostEstimate(
            flops=2 * B * S,
            transcendentals=B,
            bytes_accessed=jnp.dtype(x.dtype).itemsize * B * S + 4 * (Sw + B),
        ),
    )(x, wk, b)
    return out


def init_discriminator_params(key, seq_length):
    # nn.Linear default init: U(-1/sqrt(in_features), 1/sqrt(in_features)).
    kw, kb = jax.random.split(key)
    bound = 1.0 / math.sqrt(seq_length)
    w = jax.random.uniform(kw, (1, seq_length), jnp.float32, -bound, bound)
    b = jax.random.uniform(kb, (1, 1), jnp.float32, -bound, bound)
    return w, b


if __name__ == "__main__":
    key = jax.random.PRNGKey(0)
    kx, kp = jax.random.split(key)

    # Small shapes consistent with the module: batch=8, seq_length=32.
    batch, seq_length = 8, 32
    x = jax.random.normal(kx, (batch, seq_length), jnp.float32)
    w, b = init_discriminator_params(kp, seq_length)

    out = discriminator_forward(x, w, b)
    jax.block_until_ready(out)

    ref = jax.nn.sigmoid(x @ w.T + b)
    assert out.shape == (batch, 1)
    assert jnp.allclose(out, ref, atol=1e-5), "mismatch vs reference"

    # Ragged / multi-tile case: exercises the no-pad edge blocks, in-kernel
    # column masking and the multi-step lane-dense accumulation path.
    batch2, seq2 = 1000, 300
    kx2, _ = jax.random.split(kx)
    x2 = jax.random.normal(kx2, (batch2, seq2), jnp.float32)
    w2, b2 = init_discriminator_params(kp, seq2)
    out2 = discriminator_forward(x2, w2, b2, block_m=256, block_k=256)
    jax.block_until_ready(out2)
    ref2 = jax.nn.sigmoid(x2 @ w2.T + b2)
    assert out2.shape == (batch2, 1)
    assert jnp.allclose(out2, ref2, atol=1e-5), "mismatch vs reference (tiled)"

    # bf16 activations (half the HBM bytes for a bandwidth-bound op); f32 acc.
    batch3, seq3 = 64, 384
    x3 = jax.random.normal(kx2, (batch3, seq3), jnp.float32)
    w3, b3 = init_discriminator_params(kp, seq3)
    out3 = discriminator_forward(x3.astype(jnp.bfloat16), w3, b3)
    jax.block_until_ready(out3)
    ref3 = jax.nn.sigmoid(x3.astype(jnp.bfloat16).astype(jnp.float32) @ w3.T + b3)
    assert out3.shape == (batch3, 1)
    assert jnp.allclose(out3, ref3, atol=2e-2), "mismatch vs reference (bf16)"

    print("KERNEL_OK")
</pallas_src>

<mosaic_0001>
module attributes {stable_mosaic.version = 11 : i64} {
  func.func @_discriminator_kernel(%arg0: i32, %arg1: i32, %arg2: memref<8x128xf32, #tpu.memory_space<vmem>>, %arg3: memref<1x128xf32, #tpu.memory_space<vmem>>, %arg4: memref<1x1xf32, #tpu.memory_space<smem>>, %arg5: memref<8x1xf32, #tpu.memory_space<vmem>>, %arg6: memref<8x128xf32, #tpu.memory_space<vmem>>) attributes {dimension_semantics = [#tpu.dimension_semantics<parallel>, #tpu.dimension_semantics<arbitrary>], iteration_bounds = array<i64: 1, 1>, scalar_prefetch = 0 : i64, scratch_operands = 1 : i64, tpu.core_type = #tpu.core_type<tc>, window_params = [{transform_indices = @transform_0, window_bounds = array<i64: 8, 128>}, {pipeline_mode = #tpu.pipeline_mode<synchronous>, transform_indices = @transform_1, window_bounds = array<i64: 1, 128>}, {transform_indices = @transform_2, window_bounds = array<i64: 1, 1>}, {transform_indices = @transform_3, window_bounds = array<i64: 8, 1>}]} {
    %c0_i32 = arith.constant 0 : i32
    %0 = arith.cmpi eq, %arg1, %c0_i32 : i32
    %1 = arith.extui %0 : i1 to i32
    %c0_i32_0 = arith.constant 0 : i32
    %2 = arith.cmpi ne, %1, %c0_i32_0 : i32
    scf.if %2 {
      %cst_10 = arith.constant 0.000000e+00 : f32
      %24 = vector.broadcast %cst_10 : f32 to vector<8x128xf32>
      %c0_11 = arith.constant 0 : index
      %c0_12 = arith.constant 0 : index
      %25 = vector.load %arg6[%c0_11, %c0_12] : memref<8x128xf32, #tpu.memory_space<vmem>>, vector<8x128xf32>
      tpu.vector_store %arg6[%c0_11, %c0_12], %24 {strides = array<i32>} : memref<8x128xf32, #tpu.memory_space<vmem>>, vector<8x128xf32>,
    } else {
    }
    %c0 = arith.constant 0 : index
    %c0_1 = arith.constant 0 : index
    %3 = vector.load %arg2[%c0, %c0_1] : memref<8x128xf32, #tpu.memory_space<vmem>>, vector<8x128xf32>
    %c128_i32 = arith.constant 128 : i32
    %4 = arith.muli %arg1, %c128_i32 : i32
    %5 = tpu.assume_multiple %4, 128 : i32
    %c0_2 = arith.constant 0 : index
    %6 = arith.index_cast %5 : i32 to index
    %7 = vector.load %arg3[%c0_2, %6] : memref<1x128xf32, #tpu.memory_space<vmem>>, vector<1x128xf32>
    %8 = vector.broadcast %7 : vector<1x128xf32> to vector<8x128xf32>
    %9 = arith.mulf %3, %8 : vector<8x128xf32>
    %c128_i32_3 = arith.constant 128 : i32
    %10 = arith.muli %arg1, %c128_i32_3 : i32
    %11 = tpu.iota {dimensions = array<i32: 1>} : vector<8x128xi32>
    %12 = vector.broadcast %10 : i32 to vector<8x128xi32>
    %13 = arith.addi %12, %11 : vector<8x128xi32>
    %c32_i32 = arith.constant 32 : i32
    %14 = vector.broadcast %c32_i32 : i32 to vector<8x128xi32>
    %15 = arith.cmpi slt, %13, %14 : vector<8x128xi32>
    %cst = arith.constant 0.000000e+00 : f32
    %16 = vector.broadcast %cst : f32 to vector<8x128xf32>
    %17 = arith.select %15, %9, %16 : vector<8x128xi1>, vector<8x128xf32>
    %c0_4 = arith.constant 0 : index
    %c0_5 = arith.constant 0 : index
    %18 = vector.load %arg6[%c0_4, %c0_5] : memref<8x128xf32, #tpu.memory_space<vmem>>, vector<8x128xf32>
    %19 = arith.addf %18, %17 : vector<8x128xf32>
    %c0_6 = arith.constant 0 : index
    %c0_7 = arith.constant 0 : index
    %20 = vector.load %arg6[%c0_6, %c0_7] : memref<8x128xf32, #tpu.memory_space<vmem>>, vector<8x128xf32>
    tpu.vector_store %arg6[%c0_6, %c0_7], %19 {strides = array<i32>} : memref<8x128xf32, #tpu.memory_space<vmem>>, vector<8x128xf32>,
    %c0_i32_8 = arith.constant 0 : i32
    %21 = arith.cmpi eq, %arg1, %c0_i32_8 : i32
    %22 = arith.extui %21 : i1 to i32
    %c0_i32_9 = arith.constant 0 : i32
    %23 = arith.cmpi ne, %22, %c0_i32_9 : i32
    scf.if %23 {
      %c0_10 = arith.constant 0 : index
      %c0_11 = arith.constant 0 : index
      %24 = vector.load %arg6[%c0_10, %c0_11] : memref<8x128xf32, #tpu.memory_space<vmem>>, vector<8x128xf32>
      %cst_12 = arith.constant dense<0.000000e+00> : vector<8xf32>
      %25 = vector.multi_reduction <add>, %24, %cst_12 [1] : vector<8x128xf32> to vector<8xf32>
      %26 = vector.shape_cast %25 : vector<8xf32> to vector<8x1xf32>
      %c0_13 = arith.constant 0 : index
      %c0_14 = arith.constant 0 : index
      %27 = memref.load %arg4[%c0_13, %c0_14] : memref<1x1xf32, #tpu.memory_space<smem>>
      %28 = vector.broadcast %27 : f32 to vector<8x1xf32>
      %29 = arith.addf %26, %28 : vector<8x1xf32>
      %30 = arith.negf %29 : vector<8x1xf32>
      %31 = math.exp %30 : vector<8x1xf32>
      %cst_15 = arith.constant 1.000000e+00 : f32
      %32 = vector.broadcast %cst_15 : f32 to vector<8x1xf32>
      %33 = arith.addf %32, %31 : vector<8x1xf32>
      %34 = arith.divf %32, %33 : vector<8x1xf32>
      %c0_16 = arith.constant 0 : index
      %c0_17 = arith.constant 0 : index
      %35 = vector.load %arg5[%c0_16, %c0_17] : memref<8x1xf32, #tpu.memory_space<vmem>>, vector<8x1xf32>
      tpu.vector_store %arg5[%c0_16, %c0_17], %34 {strides = array<i32>} : memref<8x1xf32, #tpu.memory_space<vmem>>, vector<8x1xf32>,
    } else {
    }
    return
  }
  func.func @transform_0(%arg0: i32, %arg1: i32) -> (i32, i32) {
    %c0_i32 = arith.constant 0 : i32
    return %arg0, %arg1 : i32, i32
  }
  func.func @transform_1(%arg0: i32, %arg1: i32) -> (i32, i32) {
    %c0_i32 = arith.constant 0 : i32
    %c0_i32_0 = arith.constant 0 : i32
    %c0_i32_1 = arith.constant 0 : i32
    return %c0_i32, %c0_i32_0 : i32, i32
  }
  func.func @transform_2(%arg0: i32, %arg1: i32) -> (i32, i32) {
    %c0_i32 = arith.constant 0 : i32
    %c0_i32_0 = arith.constant 0 : i32
    %c0_i32_1 = arith.constant 0 : i32
    return %c0_i32, %c0_i32_0 : i32, i32
  }
  func.func @transform_3(%arg0: i32, %arg1: i32) -> (i32, i32) {
    %c0_i32 = arith.constant 0 : i32
    %c0_i32_0 = arith.constant 0 : i32
    return %arg0, %c0_i32 : i32, i32
  }
}

</mosaic_0001>

<llo_original>
// kernel: tpu_custom_call.1
$region0: #{tpu_custom_call.1}
  #allocation0 [shape = 'u32[]', space=smem, size = 0x4, offset = 0x4, fixed_abs, tag = 'smem constant byte address 0x4 - core index']
  #allocation1 [shape = 'u32[144,128]{1,0:T(1,128)}', space=vmem, size = 0x12000, scoped, tag = 'internal scratch']
  #allocation2 [shape = 'f32[8,128]{1,0:T(8,128)}', space=vmem, size = 0x1000, scoped, tag = 'scratch operand']
  #allocation3 [shape = 'f32[1,1]{1,0:T(1,128)S(6)}', space=smem, size = 0x200, scoped, tag = 'scoped memory for tpu_custom_call.1']
  %s0 = inlined_call_operand.hbm [shape: f32[8,32], index: 0, kind: input, shape index: {}]
  %s1 = inlined_call_operand.vmem [shape: f32[1,128], index: 1, kind: input, shape index: {}]
  %s2 = inlined_call_operand.<no memory space> [shape: f32[1,1], index: 2, kind: input, shape index: {}]
  %s3 = inlined_call_operand.vmem [shape: f32[8,1], index: 3, kind: output, shape index: {}]
  %s4 = sld [smem:[#allocation0]]
  $region34: #{tpu_custom_call.1} parent=0
    _
  %s6 = ssub.s32 1, %s4
  %s7 = scalar_select 0, %s6, %s4
  %8 = sst [smem:[#allocation3]] %s2
  $region1: #{tpu_custom_call.1} parent=0
    #allocation4 [shape = 'u8[4096]{0}', space=vmem, size = 0x1000, scoped, tag = 'input window, operand 0, single buffered']
    #allocation5 [shape = 's32[1]{0}', space=sflag, size = 0x4, scoped, tag = 'scoped memory for tpu_custom_call.1']
    %9 = vsyncpa [#allocation5], 0
    // Predicated region
    $region2: #{tpu_custom_call.1} parent=1 // pred_check
      _
    $region3: #{tpu_custom_call.1} parent=1 // pred_check_branch
      %11 = sbr.rel (0) target = $region5
    $region4: #{tpu_custom_call.1} parent=1 // pred_region
      %s13 = ssub.s32 128, 128
      %14 = vsyncadd [#allocation5], %s13
      %s16 = sshll.u32 [#allocation4], 4
      %s17 = int_to_ptr.vmem [resolvable:$true] %s16
      %19 = dma.hbm_to_vmem [thread:$0]  %s0, 128, %s17, [#allocation5]
    $region5: #{tpu_custom_call.1} parent=1 // pred_fallthru
      _
    // Predicated region
    $region6: #{tpu_custom_call.1} parent=1 // pred_check
      _
    $region7: #{tpu_custom_call.1} parent=1 // pred_check_branch
      %21 = sbr.rel (0) target = $region9
    $region8: #{tpu_custom_call.1} parent=1 // pred_region
      _
    $region9: #{tpu_custom_call.1} parent=1 // pred_fallthru
      _
    // Predicated region
    $region10: #{tpu_custom_call.1} parent=1 // pred_check
      _
    $region11: #{tpu_custom_call.1} parent=1 // pred_check_branch
      %23 = sbr.rel (0) target = $region13
    $region12: #{tpu_custom_call.1} parent=1 // pred_region
      _
    $region13: #{tpu_custom_call.1} parent=1 // pred_fallthru
      _
    // Predicated region
    $region14: #{tpu_custom_call.1} parent=1 // pred_check
      _
    $region15: #{tpu_custom_call.1} parent=1 // pred_check_branch
      %25 = sbr.rel (0) target = $region17
    $region16: #{tpu_custom_call.1} parent=1 // pred_region
      %26 = dma.done [#allocation5], 128
    $region17: #{tpu_custom_call.1} parent=1 // pred_fallthru
      _
    %p27 = scmp.eq.s32.totalorder 0, 0
    // Predicated region
    $region18: #{tpu_custom_call.1} parent=1 // pred_check
      %p28 = pneg %p27
    $region19: #{tpu_custom_call.1} parent=1 // pred_check_branch
      %30 = sbr.rel (%p28) target = $region21
    $region20: #{tpu_custom_call.1} parent=1 // pred_region
      %31 = vst [vmem:[#allocation2] sm:$0xff] 0.0
    $region21: #{tpu_custom_call.1} parent=1 // pred_fallthru
      _
    %v32 = vld [vmem:[#allocation4] sm:$0xff]
    %s33 = smul.u32 0, 128
    %s34 = sshra.s32 %s33, 7
    %s35 = sand.u32 %s33, 127
    %s36 = scalar_lea.vmem %s1, %s34
    %v37 = vld [vmem:[%s36] sm:$0x1]
    %v39 = vlaneseq
    %v40 = vshrl.u32 %v39, 7
    %v41 = vsub.s32 0, %v40
    %v42 = vrot.slane %v37, %v41
    %v44 = vmul.f32 %v32, %v42
    %v45 = vlaneseq
    %v46 = vand.u32 %v45, 127
    %v47 = vstv %s33
    %v48 = vadd.s32 %v47, %v46
    %vm49 = vcmp.lt.s32.totalorder %v48, 32
    %v50 = vsel %vm49, %v44, 0.0
    %v51 = vld [vmem:[#allocation2] sm:$0xff]
    %v52 = vadd.f32 %v51, %v50
    %53 = vst [vmem:[#allocation2] sm:$0xff] %v52
    // Predicated region
    $region22: #{tpu_custom_call.1} parent=1 // pred_check
      %p54 = pneg %p27
    $region23: #{tpu_custom_call.1} parent=1 // pred_check_branch
      %56 = sbr.rel (%p54) target = $region25
    $region24: #{tpu_custom_call.1} parent=1 // pred_region
      %v57 = vld [vmem:[#allocation2] sm:$0xff]
      %58 = vadd.xlane.f32.xlu0 %v57
      %v59 = vpop.xlane.xlu0 %58
      %s60 = sld [smem:[#allocation3]]
      %v61 = vstv %s60
      %v62 = vadd.f32 %v59, %v61
      %v63 = vxor.u32 %v62, 2147483648
      %v64 = vmul.f32 %v63, 1.442695
      %v65 = vpow.pop %v64
      %v66 = vadd.f32 %v65, 1.0
      %v67 = vrcp.pop %v66
      %v68 = vmul.f32 1.0, %v67
      %vm69 = vcmask 7168
      %70 = vst.msk [vmem:[%s3] sm:$0xff] %vm69, %v68
    $region25: #{tpu_custom_call.1} parent=1 // pred_fallthru
      _
    // Predicated region
    $region26: #{tpu_custom_call.1} parent=1 // pred_check
      _
    $region27: #{tpu_custom_call.1} parent=1 // pred_check_branch
      %72 = sbr.rel (0) target = $region29
    $region28: #{tpu_custom_call.1} parent=1 // pred_region
      _
    $region29: #{tpu_custom_call.1} parent=1 // pred_fallthru
      _
    // Predicated region
    $region30: #{tpu_custom_call.1} parent=1 // pred_check
      _
    $region31: #{tpu_custom_call.1} parent=1 // pred_check_branch
      %74 = sbr.rel (0) target = $region33
    $region32: #{tpu_custom_call.1} parent=1 // pred_region
      _
    $region33: #{tpu_custom_call.1} parent=1 // pred_fallthru
      _
    %75 = vsyncpa [#allocation5], 1

</llo_original>
